<compile_context>
chip_gen: v7x
topology: tpu7x:2x2x1
jax: 0.10.0
libtpu: 0.0.40
codegen_flags: <defaults>
</compile_context>

<pallas_src>
import jax
import jax.numpy as jnp
from jax.experimental import pallas as pl
from jax.experimental.pallas import tpu as pltpu


def _make_mu_kernel(act_dim):
    def kernel(x_ref, w_ref, b_ref, o_ref):
        # x_ref: (TB, D) VMEM   w_ref: (A, D) VMEM   b_ref: (A,) SMEM
        # o_ref: (TB, A) VMEM
        x = x_ref[...]  # (TB, D) f32
        # Per-output-column multiply (VALU) + lane reduction (XLU). act_dim is
        # a small static constant, so this unrolls fully. For large act_dim /
        # obs_feat_dim one would switch to an MXU jnp.dot with a pre-transposed
        # (D, A) weight instead.
        for a in range(act_dim):
            w_row = w_ref[a:a + 1, :]                                # (1, D)
            col = jnp.sum(x * w_row, axis=-1, keepdims=True)         # (TB, 1)
            o_ref[:, a:a + 1] = (col + b_ref[a]).astype(o_ref.dtype)
    return kernel


def _pick_batch_tile(batch):
    # Largest power-of-two tile (multiple of 8) that evenly divides the batch;
    # fall back to the whole batch (block == full dim is always legal).
    for tb in (1024, 512, 256, 128, 64, 32, 16, 8):
        if batch % tb == 0:
            return tb
    return batch


@jax.jit
def mlp_gaussian_actor_forward(obs_feat, mu_weight, mu_bias, log_std):
    """Pallas forward for MLPGaussianActor.

    obs_feat : (B, D) f32
    mu_weight: (A, D) f32   (torch nn.Linear(obs_feat_dim, act_dim).weight layout)
    mu_bias  : (A,)   f32
    log_std  : (1, A) f32
    returns (mu, std) -- the parameters of Normal(mu, std).
    """
    B, D = obs_feat.shape
    A = mu_weight.shape[0]
    TB = _pick_batch_tile(B)
    grid = (B // TB,)

    cost = pl.CostEstimate(
        flops=2 * B * D * A,
        transcendentals=0,
        bytes_accessed=4 * (B * D + A * D + A + B * A),
    )

    mu = pl.pallas_call(
        _make_mu_kernel(A),
        out_shape=jax.ShapeDtypeStruct((B, A), jnp.float32),
        grid_spec=pl.GridSpec(
            grid=grid,
            in_specs=[
                pl.BlockSpec((TB, D), lambda i: (i, 0)),   # obs tiles, pipelined
                pl.BlockSpec((A, D), lambda i: (0, 0)),    # weights, resident
                pl.BlockSpec(memory_space=pltpu.SMEM),     # bias scalars in SMEM
            ],
            out_specs=pl.BlockSpec((TB, A), lambda i: (i, 0)),
        ),
        compiler_params=pltpu.CompilerParams(
            dimension_semantics=("parallel",),  # shard batch tiles across TCs (v7x)
        ),
        cost_estimate=cost,
    )(obs_feat, mu_weight, mu_bias)

    # TODO(synk): torch returns a Normal(mu, std) distribution object; Pallas has
    # no distribution type, so we return its parameters. std is obs-independent
    # and only (1, act_dim)-sized, so it stays a plain jnp op (no kernel needed).
    std = jnp.exp(log_std)
    return mu, std


if __name__ == "__main__":
    key = jax.random.PRNGKey(0)
    k_obs, k_w, k_b = jax.random.split(key, 3)

    batch, obs_feat_dim, act_dim = 8, 32, 8

    obs_feat = jax.random.normal(k_obs, (batch, obs_feat_dim), dtype=jnp.float32)
    mu_weight = jax.random.normal(k_w, (act_dim, obs_feat_dim), dtype=jnp.float32) * 0.1
    mu_bias = jax.random.normal(k_b, (act_dim,), dtype=jnp.float32) * 0.1
    log_std = jnp.zeros((1, act_dim), dtype=jnp.float32)  # torch init: zeros

    mu, std = mlp_gaussian_actor_forward(obs_feat, mu_weight, mu_bias, log_std)
    (mu, std) = jax.block_until_ready((mu, std))

    # Pure-JAX reference (full-precision accumulation).
    mu_ref = (
        jnp.einsum(
            "bd,ad->ba", obs_feat, mu_weight, precision=jax.lax.Precision.HIGHEST
        )
        + mu_bias[None, :]
    )
    std_ref = jnp.exp(log_std)

    assert mu.shape == (batch, act_dim)
    assert std.shape == (1, act_dim)
    assert jnp.allclose(mu, mu_ref, atol=1e-5, rtol=1e-5)
    assert jnp.allclose(std, std_ref)

    print("KERNEL_OK")
</pallas_src>

<mosaic_0001>
module attributes {stable_mosaic.version = 11 : i64} {
  func.func @kernel(%arg0: i32, %arg1: memref<8x32xf32, #tpu.memory_space<vmem>>, %arg2: memref<8x32xf32, #tpu.memory_space<vmem>>, %arg3: memref<8xf32, #tpu.memory_space<smem>>, %arg4: memref<8x8xf32, #tpu.memory_space<vmem>>) attributes {dimension_semantics = [#tpu.dimension_semantics<parallel>], iteration_bounds = array<i64: 1>, scalar_prefetch = 0 : i64, scratch_operands = 0 : i64, tpu.core_type = #tpu.core_type<tc>, window_params = [{transform_indices = @transform_0, window_bounds = array<i64: 8, 32>}, {pipeline_mode = #tpu.pipeline_mode<synchronous>, transform_indices = @transform_1, window_bounds = array<i64: 8, 32>}, {transform_indices = @transform_2, window_bounds = array<i64: 8>}, {transform_indices = @transform_3, window_bounds = array<i64: 8, 8>}]} {
    %c0 = arith.constant 0 : index
    %c0_0 = arith.constant 0 : index
    %0 = vector.load %arg1[%c0, %c0_0] : memref<8x32xf32, #tpu.memory_space<vmem>>, vector<8x32xf32>
    %c0_1 = arith.constant 0 : index
    %c0_2 = arith.constant 0 : index
    %1 = vector.load %arg2[%c0_1, %c0_2] : memref<8x32xf32, #tpu.memory_space<vmem>>, vector<1x32xf32>
    %2 = vector.broadcast %1 : vector<1x32xf32> to vector<8x32xf32>
    %3 = arith.mulf %0, %2 : vector<8x32xf32>
    %cst = arith.constant dense<0.000000e+00> : vector<8xf32>
    %4 = vector.multi_reduction <add>, %3, %cst [1] : vector<8x32xf32> to vector<8xf32>
    %5 = vector.shape_cast %4 : vector<8xf32> to vector<8x1xf32>
    %c0_3 = arith.constant 0 : index
    %6 = memref.load %arg3[%c0_3] : memref<8xf32, #tpu.memory_space<smem>>
    %7 = vector.broadcast %6 : f32 to vector<8x1xf32>
    %8 = arith.addf %5, %7 : vector<8x1xf32>
    %c0_4 = arith.constant 0 : index
    %c0_5 = arith.constant 0 : index
    %9 = vector.load %arg4[%c0_4, %c0_5] : memref<8x8xf32, #tpu.memory_space<vmem>>, vector<8x1xf32>
    tpu.vector_store %arg4[%c0_4, %c0_5], %8 {strides = array<i32>} : memref<8x8xf32, #tpu.memory_space<vmem>>, vector<8x1xf32>,
    %c1 = arith.constant 1 : index
    %c0_6 = arith.constant 0 : index
    %10 = vector.load %arg2[%c1, %c0_6] : memref<8x32xf32, #tpu.memory_space<vmem>>, vector<1x32xf32>
    %11 = vector.broadcast %10 : vector<1x32xf32> to vector<8x32xf32>
    %12 = arith.mulf %0, %11 : vector<8x32xf32>
    %cst_7 = arith.constant dense<0.000000e+00> : vector<8xf32>
    %13 = vector.multi_reduction <add>, %12, %cst_7 [1] : vector<8x32xf32> to vector<8xf32>
    %14 = vector.shape_cast %13 : vector<8xf32> to vector<8x1xf32>
    %c1_8 = arith.constant 1 : index
    %15 = memref.load %arg3[%c1_8] : memref<8xf32, #tpu.memory_space<smem>>
    %16 = vector.broadcast %15 : f32 to vector<8x1xf32>
    %17 = arith.addf %14, %16 : vector<8x1xf32>
    %c0_9 = arith.constant 0 : index
    %c1_10 = arith.constant 1 : index
    %18 = vector.load %arg4[%c0_9, %c1_10] : memref<8x8xf32, #tpu.memory_space<vmem>>, vector<8x1xf32>
    tpu.vector_store %arg4[%c0_9, %c1_10], %17 {strides = array<i32>} : memref<8x8xf32, #tpu.memory_space<vmem>>, vector<8x1xf32>,
    %c2 = arith.constant 2 : index
    %c0_11 = arith.constant 0 : index
    %19 = vector.load %arg2[%c2, %c0_11] : memref<8x32xf32, #tpu.memory_space<vmem>>, vector<1x32xf32>
    %20 = vector.broadcast %19 : vector<1x32xf32> to vector<8x32xf32>
    %21 = arith.mulf %0, %20 : vector<8x32xf32>
    %cst_12 = arith.constant dense<0.000000e+00> : vector<8xf32>
    %22 = vector.multi_reduction <add>, %21, %cst_12 [1] : vector<8x32xf32> to vector<8xf32>
    %23 = vector.shape_cast %22 : vector<8xf32> to vector<8x1xf32>
    %c2_13 = arith.constant 2 : index
    %24 = memref.load %arg3[%c2_13] : memref<8xf32, #tpu.memory_space<smem>>
    %25 = vector.broadcast %24 : f32 to vector<8x1xf32>
    %26 = arith.addf %23, %25 : vector<8x1xf32>
    %c0_14 = arith.constant 0 : index
    %c2_15 = arith.constant 2 : index
    %27 = vector.load %arg4[%c0_14, %c2_15] : memref<8x8xf32, #tpu.memory_space<vmem>>, vector<8x1xf32>
    tpu.vector_store %arg4[%c0_14, %c2_15], %26 {strides = array<i32>} : memref<8x8xf32, #tpu.memory_space<vmem>>, vector<8x1xf32>,
    %c3 = arith.constant 3 : index
    %c0_16 = arith.constant 0 : index
    %28 = vector.load %arg2[%c3, %c0_16] : memref<8x32xf32, #tpu.memory_space<vmem>>, vector<1x32xf32>
    %29 = vector.broadcast %28 : vector<1x32xf32> to vector<8x32xf32>
    %30 = arith.mulf %0, %29 : vector<8x32xf32>
    %cst_17 = arith.constant dense<0.000000e+00> : vector<8xf32>
    %31 = vector.multi_reduction <add>, %30, %cst_17 [1] : vector<8x32xf32> to vector<8xf32>
    %32 = vector.shape_cast %31 : vector<8xf32> to vector<8x1xf32>
    %c3_18 = arith.constant 3 : index
    %33 = memref.load %arg3[%c3_18] : memref<8xf32, #tpu.memory_space<smem>>
    %34 = vector.broadcast %33 : f32 to vector<8x1xf32>
    %35 = arith.addf %32, %34 : vector<8x1xf32>
    %c0_19 = arith.constant 0 : index
    %c3_20 = arith.constant 3 : index
    %36 = vector.load %arg4[%c0_19, %c3_20] : memref<8x8xf32, #tpu.memory_space<vmem>>, vector<8x1xf32>
    tpu.vector_store %arg4[%c0_19, %c3_20], %35 {strides = array<i32>} : memref<8x8xf32, #tpu.memory_space<vmem>>, vector<8x1xf32>,
    %c4 = arith.constant 4 : index
    %c0_21 = arith.constant 0 : index
    %37 = vector.load %arg2[%c4, %c0_21] : memref<8x32xf32, #tpu.memory_space<vmem>>, vector<1x32xf32>
    %38 = vector.broadcast %37 : vector<1x32xf32> to vector<8x32xf32>
    %39 = arith.mulf %0, %38 : vector<8x32xf32>
    %cst_22 = arith.constant dense<0.000000e+00> : vector<8xf32>
    %40 = vector.multi_reduction <add>, %39, %cst_22 [1] : vector<8x32xf32> to vector<8xf32>
    %41 = vector.shape_cast %40 : vector<8xf32> to vector<8x1xf32>
    %c4_23 = arith.constant 4 : index
    %42 = memref.load %arg3[%c4_23] : memref<8xf32, #tpu.memory_space<smem>>
    %43 = vector.broadcast %42 : f32 to vector<8x1xf32>
    %44 = arith.addf %41, %43 : vector<8x1xf32>
    %c0_24 = arith.constant 0 : index
    %c4_25 = arith.constant 4 : index
    %45 = vector.load %arg4[%c0_24, %c4_25] : memref<8x8xf32, #tpu.memory_space<vmem>>, vector<8x1xf32>
    tpu.vector_store %arg4[%c0_24, %c4_25], %44 {strides = array<i32>} : memref<8x8xf32, #tpu.memory_space<vmem>>, vector<8x1xf32>,
    %c5 = arith.constant 5 : index
    %c0_26 = arith.constant 0 : index
    %46 = vector.load %arg2[%c5, %c0_26] : memref<8x32xf32, #tpu.memory_space<vmem>>, vector<1x32xf32>
    %47 = vector.broadcast %46 : vector<1x32xf32> to vector<8x32xf32>
    %48 = arith.mulf %0, %47 : vector<8x32xf32>
    %cst_27 = arith.constant dense<0.000000e+00> : vector<8xf32>
    %49 = vector.multi_reduction <add>, %48, %cst_27 [1] : vector<8x32xf32> to vector<8xf32>
    %50 = vector.shape_cast %49 : vector<8xf32> to vector<8x1xf32>
    %c5_28 = arith.constant 5 : index
    %51 = memref.load %arg3[%c5_28] : memref<8xf32, #tpu.memory_space<smem>>
    %52 = vector.broadcast %51 : f32 to vector<8x1xf32>
    %53 = arith.addf %50, %52 : vector<8x1xf32>
    %c0_29 = arith.constant 0 : index
    %c5_30 = arith.constant 5 : index
    %54 = vector.load %arg4[%c0_29, %c5_30] : memref<8x8xf32, #tpu.memory_space<vmem>>, vector<8x1xf32>
    tpu.vector_store %arg4[%c0_29, %c5_30], %53 {strides = array<i32>} : memref<8x8xf32, #tpu.memory_space<vmem>>, vector<8x1xf32>,
    %c6 = arith.constant 6 : index
    %c0_31 = arith.constant 0 : index
    %55 = vector.load %arg2[%c6, %c0_31] : memref<8x32xf32, #tpu.memory_space<vmem>>, vector<1x32xf32>
    %56 = vector.broadcast %55 : vector<1x32xf32> to vector<8x32xf32>
    %57 = arith.mulf %0, %56 : vector<8x32xf32>
    %cst_32 = arith.constant dense<0.000000e+00> : vector<8xf32>
    %58 = vector.multi_reduction <add>, %57, %cst_32 [1] : vector<8x32xf32> to vector<8xf32>
    %59 = vector.shape_cast %58 : vector<8xf32> to vector<8x1xf32>
    %c6_33 = arith.constant 6 : index
    %60 = memref.load %arg3[%c6_33] : memref<8xf32, #tpu.memory_space<smem>>
    %61 = vector.broadcast %60 : f32 to vector<8x1xf32>
    %62 = arith.addf %59, %61 : vector<8x1xf32>
    %c0_34 = arith.constant 0 : index
    %c6_35 = arith.constant 6 : index
    %63 = vector.load %arg4[%c0_34, %c6_35] : memref<8x8xf32, #tpu.memory_space<vmem>>, vector<8x1xf32>
    tpu.vector_store %arg4[%c0_34, %c6_35], %62 {strides = array<i32>} : memref<8x8xf32, #tpu.memory_space<vmem>>, vector<8x1xf32>,
    %c7 = arith.constant 7 : index
    %c0_36 = arith.constant 0 : index
    %64 = vector.load %arg2[%c7, %c0_36] : memref<8x32xf32, #tpu.memory_space<vmem>>, vector<1x32xf32>
    %65 = vector.broadcast %64 : vector<1x32xf32> to vector<8x32xf32>
    %66 = arith.mulf %0, %65 : vector<8x32xf32>
    %cst_37 = arith.constant dense<0.000000e+00> : vector<8xf32>
    %67 = vector.multi_reduction <add>, %66, %cst_37 [1] : vector<8x32xf32> to vector<8xf32>
    %68 = vector.shape_cast %67 : vector<8xf32> to vector<8x1xf32>
    %c7_38 = arith.constant 7 : index
    %69 = memref.load %arg3[%c7_38] : memref<8xf32, #tpu.memory_space<smem>>
    %70 = vector.broadcast %69 : f32 to vector<8x1xf32>
    %71 = arith.addf %68, %70 : vector<8x1xf32>
    %c0_39 = arith.constant 0 : index
    %c7_40 = arith.constant 7 : index
    %72 = vector.load %arg4[%c0_39, %c7_40] : memref<8x8xf32, #tpu.memory_space<vmem>>, vector<8x1xf32>
    tpu.vector_store %arg4[%c0_39, %c7_40], %71 {strides = array<i32>} : memref<8x8xf32, #tpu.memory_space<vmem>>, vector<8x1xf32>,
    return
  }
  func.func @transform_0(%arg0: i32) -> (i32, i32) {
    %c0_i32 = arith.constant 0 : i32
    %c0_i32_0 = arith.constant 0 : i32
    return %arg0, %c0_i32 : i32, i32
  }
  func.func @transform_1(%arg0: i32) -> (i32, i32) {
    %c0_i32 = arith.constant 0 : i32
    %c0_i32_0 = arith.constant 0 : i32
    %c0_i32_1 = arith.constant 0 : i32
    return %c0_i32, %c0_i32_0 : i32, i32
  }
  func.func @transform_2(%arg0: i32) -> i32 {
    %c0_i32 = arith.constant 0 : i32
    %c0_i32_0 = arith.constant 0 : i32
    return %c0_i32 : i32
  }
  func.func @transform_3(%arg0: i32) -> (i32, i32) {
    %c0_i32 = arith.constant 0 : i32
    %c0_i32_0 = arith.constant 0 : i32
    return %arg0, %c0_i32 : i32, i32
  }
}

</mosaic_0001>

<llo_original>
// kernel: mlp_gaussian_actor_forward.1
$region0: #{mlp_gaussian_actor_forward.1}
  #allocation0 [shape = 'u32[]', space=smem, size = 0x4, offset = 0x4, fixed_abs, tag = 'smem constant byte address 0x4 - core index']
  #allocation1 [shape = 'u32[144,128]{1,0:T(1,128)}', space=vmem, size = 0x12000, scoped, tag = 'internal scratch']
  %s0 = inlined_call_operand.hbm [shape: f32[8,32], index: 0, kind: input, shape index: {}]
  %s1 = inlined_call_operand.hbm [shape: f32[8,32], index: 1, kind: input, shape index: {}]
  %s2 = inlined_call_operand.vmem [shape: f32[8], index: 2, kind: input, shape index: {}]
  %s3 = inlined_call_operand.hbm [shape: f32[8,8], index: 3, kind: output, shape index: {}]
  %s4 = sld [smem:[#allocation0]]
  $region34: #{mlp_gaussian_actor_forward.1} parent=0
    _
  %s6 = ssub.s32 1, %s4
  %s7 = scalar_select 0, %s6, %s4
  $region1: #{mlp_gaussian_actor_forward.1} parent=0
    #allocation2 [shape = 'u8[4096]{0}', space=vmem, size = 0x1000, scoped, tag = 'input window, operand 0, single buffered']
    #allocation3 [shape = 's32[1]{0}', space=sflag, size = 0x4, scoped, tag = 'scoped memory for mlp_gaussian_actor_forward.1']
    #allocation4 [shape = 's32[1]{0}', space=sflag, size = 0x4, scoped, tag = 'scoped memory for mlp_gaussian_actor_forward.1']
    #allocation5 [shape = 's32[1]{0}', space=sflag, size = 0x4, scoped, tag = 'scoped memory for mlp_gaussian_actor_forward.1']
    #allocation6 [shape = 'u8[4096]{0}', space=vmem, size = 0x1000, scoped, tag = 'input window, operand 1, single buffered']
    #allocation7 [shape = 's32[1]{0}', space=sflag, size = 0x4, scoped, tag = 'scoped memory for mlp_gaussian_actor_forward.1']
    #allocation8 [shape = 'u8[512]{0}', space=smem, size = 0x200, scoped, tag = 'input window, operand 2, single buffered']
    #allocation9 [shape = 'u8[4096]{0}', space=vmem, size = 0x1000, scoped, tag = 'output window, operand 0, single buffered']
    %8 = vsyncpa [#allocation3], 0
    %9 = vsyncpa [#allocation7], 0
    %10 = vsyncpa [#allocation5], 0
    %11 = vsyncpa [#allocation4], 0
    // Predicated region
    $region2: #{mlp_gaussian_actor_forward.1} parent=1 // pred_check
      _
    $region3: #{mlp_gaussian_actor_forward.1} parent=1 // pred_check_branch
      %13 = sbr.rel (0) target = $region5
    $region4: #{mlp_gaussian_actor_forward.1} parent=1 // pred_region
      %s15 = ssub.s32 128, 128
      %16 = vsyncadd [#allocation3], %s15
      %s18 = sshll.u32 [#allocation2], 4
      %s19 = int_to_ptr.vmem [resolvable:$true] %s18
      %21 = dma.hbm_to_vmem [thread:$0]  %s0, 128, %s19, [#allocation3]
    $region5: #{mlp_gaussian_actor_forward.1} parent=1 // pred_fallthru
      _
    // Predicated region
    $region6: #{mlp_gaussian_actor_forward.1} parent=1 // pred_check
      _
    $region7: #{mlp_gaussian_actor_forward.1} parent=1 // pred_check_branch
      %23 = sbr.rel (0) target = $region9
    $region8: #{mlp_gaussian_actor_forward.1} parent=1 // pred_region
      %s25 = ssub.s32 128, 128
      %26 = vsyncadd [#allocation7], %s25
      %s28 = sshll.u32 [#allocation6], 4
      %s29 = int_to_ptr.vmem [resolvable:$true] %s28
      %31 = dma.hbm_to_vmem [thread:$0]  %s1, 128, %s29, [#allocation7]
    $region9: #{mlp_gaussian_actor_forward.1} parent=1 // pred_fallthru
      _
    // Predicated region
    $region10: #{mlp_gaussian_actor_forward.1} parent=1 // pred_check
      _
    $region11: #{mlp_gaussian_actor_forward.1} parent=1 // pred_check_branch
      %33 = sbr.rel (0) target = $region13
    $region12: #{mlp_gaussian_actor_forward.1} parent=1 // pred_region
      %s35 = ssub.s32 16, 16
      %36 = vsyncadd [#allocation5], %s35
      %s38 = sshll.u32 %s2, 4
      %s39 = int_to_ptr.vmem [resolvable:$true] %s38
      %41 = dma.vmem_to_smem %s39, 16, [#allocation8], [#allocation5]
    $region13: #{mlp_gaussian_actor_forward.1} parent=1 // pred_fallthru
      _
    // Predicated region
    $region14: #{mlp_gaussian_actor_forward.1} parent=1 // pred_check
      _
    $region15: #{mlp_gaussian_actor_forward.1} parent=1 // pred_check_branch
      %43 = sbr.rel (0) target = $region17
    $region16: #{mlp_gaussian_actor_forward.1} parent=1 // pred_region
      %44 = dma.done [#allocation3], 128
    $region17: #{mlp_gaussian_actor_forward.1} parent=1 // pred_fallthru
      _
    // Predicated region
    $region18: #{mlp_gaussian_actor_forward.1} parent=1 // pred_check
      _
    $region19: #{mlp_gaussian_actor_forward.1} parent=1 // pred_check_branch
      %46 = sbr.rel (0) target = $region21
    $region20: #{mlp_gaussian_actor_forward.1} parent=1 // pred_region
      %47 = dma.done [#allocation7], 128
    $region21: #{mlp_gaussian_actor_forward.1} parent=1 // pred_fallthru
      _
    // Predicated region
    $region22: #{mlp_gaussian_actor_forward.1} parent=1 // pred_check
      _
    $region23: #{mlp_gaussian_actor_forward.1} parent=1 // pred_check_branch
      %49 = sbr.rel (0) target = $region25
    $region24: #{mlp_gaussian_actor_forward.1} parent=1 // pred_region
      %50 = dma.done [#allocation5], 16
    $region25: #{mlp_gaussian_actor_forward.1} parent=1 // pred_fallthru
      _
    %51 = sfence
    %v52 = vld [vmem:[#allocation2] sm:$0xff]
    %v53 = vld [vmem:[#allocation6] sm:$0x1]
    %v54 = vlaneseq
    %v55 = vshrl.u32 %v54, 7
    %v56 = vsub.s32 0, %v55
    %v57 = vrot.slane %v53, %v56
    %v58 = vmul.f32 %v52, %v57
    %vm59 = vcmask 261120
    %v60 = vsel %vm59, %v58, 0.0
    %61 = vadd.xlane.f32.xlu0 %v60
    %v62 = vpop.xlane.xlu0 %61
    %s63 = sld [smem:[#allocation8]]
    %v64 = vstv %s63
    %v65 = vadd.f32 %v62, %v64
    %vm66 = vcmask 7168
    %67 = vst.msk [vmem:[#allocation9] sm:$0xff] %vm66, %v65
    %v68 = vld [vmem:[#allocation6 + $0x1] sm:$0x1]
    %v69 = vlaneseq
    %v70 = vshrl.u32 %v69, 7
    %v71 = vsub.s32 0, %v70
    %v72 = vrot.slane %v68, %v71
    %v73 = vmul.f32 %v52, %v72
    %v74 = vsel %vm59, %v73, 0.0
    %75 = vadd.xlane.f32.xlu0 %v74
    %v76 = vpop.xlane.xlu0 %75
    %s77 = sld [smem:[#allocation8 + $0x1]]
    %v78 = vstv %s77
    %v79 = vadd.f32 %v76, %v78
    %vm80 = vcmask 15368
    %81 = vst.msk [vmem:[#allocation9] sm:$0xff] %vm80, %v79
    %v82 = vld [vmem:[#allocation6 + $0x2] sm:$0x1]
    %v83 = vlaneseq
    %v84 = vshrl.u32 %v83, 7
    %v85 = vsub.s32 0, %v84
    %v86 = vrot.slane %v82, %v85
    %v87 = vmul.f32 %v52, %v86
    %v88 = vsel %vm59, %v87, 0.0
    %89 = vadd.xlane.f32.xlu0 %v88
    %v90 = vpop.xlane.xlu0 %89
    %s91 = sld [smem:[#allocation8 + $0x2]]
    %v92 = vstv %s91
    %v93 = vadd.f32 %v90, %v92
    %vm94 = vcmask 23568
    %95 = vst.msk [vmem:[#allocation9] sm:$0xff] %vm94, %v93
    %v96 = vld [vmem:[#allocation6 + $0x3] sm:$0x1]
    %v97 = vlaneseq
    %v98 = vshrl.u32 %v97, 7
    %v99 = vsub.s32 0, %v98
    %v100 = vrot.slane %v96, %v99
    %v101 = vmul.f32 %v52, %v100
    %v102 = vsel %vm59, %v101, 0.0
    %103 = vadd.xlane.f32.xlu0 %v102
    %v104 = vpop.xlane.xlu0 %103
    %s105 = sld [smem:[#allocation8 + $0x3]]
    %v106 = vstv %s105
    %v107 = vadd.f32 %v104, %v106
    %vm108 = vcmask 31768
    %109 = vst.msk [vmem:[#allocation9] sm:$0xff] %vm108, %v107
    %v110 = vld [vmem:[#allocation6 + $0x4] sm:$0x1]
    %v111 = vlaneseq
    %v112 = vshrl.u32 %v111, 7
    %v113 = vsub.s32 0, %v112
    %v114 = vrot.slane %v110, %v113
    %v115 = vmul.f32 %v52, %v114
    %v116 = vsel %vm59, %v115, 0.0
    %117 = vadd.xlane.f32.xlu0 %v116
    %v118 = vpop.xlane.xlu0 %117
    %s119 = sld [smem:[#allocation8 + $0x4]]
    %v120 = vstv %s119
    %v121 = vadd.f32 %v118, %v120
    %vm122 = vcmask 39968
    %123 = vst.msk [vmem:[#allocation9] sm:$0xff] %vm122, %v121
    %v124 = vld [vmem:[#allocation6 + $0x5] sm:$0x1]
    %v125 = vlaneseq
    %v126 = vshrl.u32 %v125, 7
    %v127 = vsub.s32 0, %v126
    %v128 = vrot.slane %v124, %v127
    %v129 = vmul.f32 %v52, %v128
    %v130 = vsel %vm59, %v129, 0.0
    %131 = vadd.xlane.f32.xlu0 %v130
    %v132 = vpop.xlane.xlu0 %131
    %s133 = sld [smem:[#allocation8 + $0x5]]
    %v134 = vstv %s133
    %v135 = vadd.f32 %v132, %v134
    %vm136 = vcmask 48168
    %137 = vst.msk [vmem:[#allocation9] sm:$0xff] %vm136, %v135
    %v138 = vld [vmem:[#allocation6 + $0x6] sm:$0x1]
    %v139 = vlaneseq
    %v140 = vshrl.u32 %v139, 7
    %v141 = vsub.s32 0, %v140
    %v142 = vrot.slane %v138, %v141
    %v143 = vmul.f32 %v52, %v142
    %v144 = vsel %vm59, %v143, 0.0
    %145 = vadd.xlane.f32.xlu0 %v144
    %v146 = vpop.xlane.xlu0 %145
    %s147 = sld [smem:[#allocation8 + $0x6]]
    %v148 = vstv %s147
    %v149 = vadd.f32 %v146, %v148
    %vm150 = vcmask 56368
    %151 = vst.msk [vmem:[#allocation9] sm:$0xff] %vm150, %v149
    %v152 = vld [vmem:[#allocation6 + $0x7] sm:$0x1]
    %v153 = vlaneseq
    %v154 = vshrl.u32 %v153, 7
    %v155 = vsub.s32 0, %v154
    %v156 = vrot.slane %v152, %v155
    %v157 = vmul.f32 %v52, %v156
    %v158 = vsel %vm59, %v157, 0.0
    %159 = vadd.xlane.f32.xlu0 %v158
    %v160 = vpop.xlane.xlu0 %159
    %s161 = sld [smem:[#allocation8 + $0x7]]
    %v162 = vstv %s161
    %v163 = vadd.f32 %v160, %v162
    %vm164 = vcmask 64568
    %165 = vst.msk [vmem:[#allocation9] sm:$0xff] %vm164, %v163
    // Predicated region
    $region26: #{mlp_gaussian_actor_forward.1} parent=1 // pred_check
      _
    $region27: #{mlp_gaussian_actor_forward.1} parent=1 // pred_check_branch
      %167 = sbr.rel (0) target = $region29
    $region28: #{mlp_gaussian_actor_forward.1} parent=1 // pred_region
      %s169 = ssub.s32 128, 128
      %170 = vsyncadd [#allocation4], %s169
      %s172 = sshll.u32 [#allocation9], 4
      %s173 = int_to_ptr.vmem [resolvable:$true] %s172
      %175 = dma.vmem_to_hbm [thread:$0]  %s173, 128, %s3, [#allocation4]
    $region29: #{mlp_gaussian_actor_forward.1} parent=1 // pred_fallthru
      _
    // Predicated region
    $region30: #{mlp_gaussian_actor_forward.1} parent=1 // pred_check
      _
    $region31: #{mlp_gaussian_actor_forward.1} parent=1 // pred_check_branch
      %177 = sbr.rel (0) target = $region33
    $region32: #{mlp_gaussian_actor_forward.1} parent=1 // pred_region
      %178 = dma.done [#allocation4], 128
    $region33: #{mlp_gaussian_actor_forward.1} parent=1 // pred_fallthru
      _
    %179 = vsyncpa [#allocation3], 1
    %180 = vsyncpa [#allocation7], 1
    %181 = vsyncpa [#allocation4], 1
    %182 = vsyncpa [#allocation5], 1

</llo_original>
